<compile_context>
chip_gen: v7x
topology: tpu7x:2x2x1
jax: 0.10.0
libtpu: 0.0.40
codegen_flags: <defaults>
</compile_context>

<pallas_src>
import functools

import jax
import jax.numpy as jnp
from jax.experimental import pallas as pl
from jax.experimental.pallas import tpu as pltpu


def _round_up(x, m):
    return ((x + m - 1) // m) * m


def _sort_both_halves_axis0(x, n_half):
    """x: (2*n_half, k). Sort rows [0, n_half) and [n_half, 2*n_half)
    independently along axis 0 (ascending, column-wise) with a tile-wide
    odd-even transposition network: each phase = 2 sublane rolls (XLU) + one
    masked min/max select (VPU) over the whole tile. Exactly n_half phases
    are required for a guaranteed sort."""
    rows = x.shape[0]                      # 2 * n_half (static)
    local = jax.lax.broadcasted_iota(jnp.int32, x.shape, 0) % n_half
    is_even = (local % 2) == 0
    not_first = local > 0
    not_last = local < (n_half - 1)
    # parity 0 phases pair (even, even+1); parity 1 phases pair (odd, odd+1)
    lower_mask = (is_even & not_last, (~is_even) & not_last)
    upper_mask = ((~is_even) & not_first, is_even & not_first)

    def phase(xv, par):
        nbr_next = pltpu.roll(xv, shift=rows - 1, axis=0)  # [i] = xv[(i+1) % rows]
        nbr_prev = pltpu.roll(xv, shift=1, axis=0)         # [i] = xv[(i-1) % rows]
        return jnp.where(
            lower_mask[par], jnp.minimum(xv, nbr_next),
            jnp.where(upper_mask[par], jnp.maximum(xv, nbr_prev), xv))

    if n_half <= 16:
        # Small batch: full static unroll keeps the whole chain visible to LLO.
        for ph in range(n_half):
            x = phase(x, ph % 2)
        return x

    # Larger batch: one even + one odd phase per iteration so the mask sets
    # stay static; extra phases past n_half are harmless (already sorted).
    # TODO(synk): replace with a bitonic network for O(log^2 n) phases.
    n_pairs = (n_half + 1) // 2

    def body(_, xv):
        return phase(phase(xv, 0), 1)

    return jax.lax.fori_loop(0, n_pairs, body, x, unroll=2)


def _swd_kernel(z_ref, p_ref, w_ref, out_ref, proj_ref, *, n, n_pad):
    # Two MXU passes against the same (hot) W block; f32 accumulators land in
    # the two sublane-aligned halves of the VMEM scratch.
    w = w_ref[...]
    proj_ref[pl.ds(0, n_pad), :] = jnp.dot(
        z_ref[...], w, preferred_element_type=jnp.float32)
    proj_ref[pl.ds(n_pad, n_pad), :] = jnp.dot(
        p_ref[...], w, preferred_element_type=jnp.float32)

    x = proj_ref[...]                                   # (2*n_pad, np_block)

    # Padded rows (if any): identical large finite sentinel in both halves so
    # they sort to the tail and contribute diff == 0.
    if n != n_pad:
        local = jax.lax.broadcasted_iota(jnp.int32, x.shape, 0) % n_pad
        x = jnp.where(local >= n,
                      jnp.float32(jnp.finfo(jnp.float32).max), x)

    # Column-wise sort of both halves simultaneously.
    s = _sort_both_halves_axis0(x, n_pad)

    # Partial sum of squared differences for this projection block.
    diff = s[:n_pad, :] - s[n_pad:, :]                  # aligned half slices
    sq = diff * diff
    # Lane reduce on the (otherwise idle) MXU instead of the XLU.
    ones = jnp.ones((sq.shape[1], 1), jnp.float32)
    row_sums = jnp.dot(sq, ones, preferred_element_type=jnp.float32)  # (n_pad, 1)
    out_ref[0, 0] = jnp.sum(row_sums)


@jax.jit
def swd_loss_pallas(z, p, w):
    n, d = z.shape
    dw, n_proj = w.shape
    assert dw == d

    # Match torch (`W = z.new_empty(...)`): W takes z's dtype, keeping bf16
    # callers on the fast MXU path.  Sort / MSE run in the f32 accumulator.
    w = w.astype(z.dtype)

    LANE = 128
    SUB = 8

    d_pad = _round_up(d, LANE)                  # contraction dim -> lane-dense
    n_pad = _round_up(n, SUB)                   # rows -> sublane-aligned halves
    np_pad = _round_up(n_proj, LANE)            # projection dim -> lane-dense
    np_block = next(c for c in (512, 384, 256, 128) if np_pad % c == 0)
    num_blocks = np_pad // np_block

    # Zero padding is result-preserving: padded K contributes 0 to the dot,
    # padded projection columns are 0 in both halves (diff 0), padded rows are
    # replaced by a sentinel inside the kernel (diff 0).
    if d_pad != d:
        z = jnp.pad(z, ((0, 0), (0, d_pad - d)))
        p = jnp.pad(p, ((0, 0), (0, d_pad - d)))
        w = jnp.pad(w, ((0, d_pad - d), (0, 0)))
    if n_pad != n:
        z = jnp.pad(z, ((0, n_pad - n), (0, 0)))
        p = jnp.pad(p, ((0, n_pad - n), (0, 0)))
    if np_pad != n_proj:
        w = jnp.pad(w, ((0, 0), (0, np_pad - n_proj)))

    kernel = functools.partial(_swd_kernel, n=n, n_pad=n_pad)

    # Conservative VMEM budget: inputs (double-buffered by the pipeline),
    # W block (double-buffered), f32 projection scratch, plus headroom.
    itemsize = jnp.dtype(z.dtype).itemsize
    est = (4 * n_pad * d_pad * itemsize          # z + p, x2 buffers each
           + 2 * d_pad * np_block * itemsize     # w block, double-buffered
           + 2 * n_pad * np_block * 4            # projection scratch (f32)
           + (2 << 20))
    vmem_limit = int(min(max(est, 32 << 20), 48 << 20))

    partials = pl.pallas_call(
        kernel,
        out_shape=jax.ShapeDtypeStruct((num_blocks, 1), jnp.float32),
        grid=(num_blocks,),
        in_specs=[
            pl.BlockSpec((n_pad, d_pad), lambda j: (0, 0)),      # z (resident)
            pl.BlockSpec((n_pad, d_pad), lambda j: (0, 0)),      # p (resident)
            pl.BlockSpec((d_pad, np_block), lambda j: (0, j)),   # W column block
        ],
        out_specs=pl.BlockSpec((1, 1), lambda j: (j, 0),
                               memory_space=pltpu.MemorySpace.SMEM),
        scratch_shapes=[pltpu.VMEM((2 * n_pad, np_block), jnp.float32)],
        compiler_params=pltpu.CompilerParams(
            dimension_semantics=("parallel",),
            vmem_limit_bytes=vmem_limit),
    )(z, p, w)

    inv_size = 1.0 / float(n * n_proj)          # mean over ORIGINAL n * np
    return jnp.sum(partials) * jnp.float32(inv_size)


def orthogonal_init(key, d, n_proj, dtype=jnp.float32):
    """Deterministic stand-in for nn.init.orthogonal_ on a (d, n_proj) matrix."""
    rows, cols = d, n_proj
    flat = jax.random.normal(key, (max(rows, cols), min(rows, cols)),
                             dtype=jnp.float32)
    q, r = jnp.linalg.qr(flat)
    sgn = jnp.where(jnp.diag(r) >= 0, 1.0, -1.0)   # sign convention (match torch)
    q = q * sgn[None, :]
    if rows < cols:
        q = q.T
    return q[:rows, :cols].astype(dtype)


def gaussian_sampler(key):
    """sampler(z) -> prior samples with the same shape as z (deterministic)."""
    def sampler(z):
        return jax.random.normal(key, z.shape, dtype=z.dtype)
    return sampler


def swd_reference(z, p, w):
    zp = jnp.sort(z.astype(jnp.float32) @ w.astype(jnp.float32), axis=0)
    pp = jnp.sort(p.astype(jnp.float32) @ w.astype(jnp.float32), axis=0)
    return jnp.mean((zp - pp) ** 2)


if __name__ == "__main__":
    n, d = 8, 32          # z: (batch, feature); np defaults to d -> W: (d, d)
    key = jax.random.PRNGKey(0)
    kz, kp, kw = jax.random.split(key, 3)

    z = jax.random.normal(kz, (n, d), dtype=jnp.float32)
    sampler = gaussian_sampler(kp)
    p = sampler(z)                                     # sampler(z), shape (n, d)
    W = orthogonal_init(kw, d, d, dtype=jnp.float32)   # orthogonal projections

    loss = jax.block_until_ready(swd_loss_pallas(z, p, W))

    ref = swd_reference(z, p, W)
    assert jnp.allclose(loss, ref, rtol=1e-5, atol=1e-5), (loss, ref)

    print("KERNEL_OK")
</pallas_src>

<mosaic_0001>
module attributes {stable_mosaic.version = 11 : i64} {
  func.func @_swd_kernel(%arg0: i32, %arg1: memref<8x128xf32, #tpu.memory_space<vmem>>, %arg2: memref<8x128xf32, #tpu.memory_space<vmem>>, %arg3: memref<128x128xf32, #tpu.memory_space<vmem>>, %arg4: memref<1x1xf32, #tpu.memory_space<smem>>, %arg5: memref<16x128xf32, #tpu.memory_space<vmem>>) attributes {dimension_semantics = [#tpu.dimension_semantics<parallel>], iteration_bounds = array<i64: 1>, scalar_prefetch = 0 : i64, scratch_operands = 1 : i64, tpu.core_type = #tpu.core_type<tc>, window_params = [{pipeline_mode = #tpu.pipeline_mode<synchronous>, transform_indices = @transform_0, window_bounds = array<i64: 8, 128>}, {pipeline_mode = #tpu.pipeline_mode<synchronous>, transform_indices = @transform_1, window_bounds = array<i64: 8, 128>}, {transform_indices = @transform_2, window_bounds = array<i64: 128, 128>}, {transform_indices = @transform_3, window_bounds = array<i64: 1, 1>}]} {
    %c0 = arith.constant 0 : index
    %c0_0 = arith.constant 0 : index
    %0 = vector.load %arg3[%c0, %c0_0] : memref<128x128xf32, #tpu.memory_space<vmem>>, vector<128x128xf32>
    %c0_1 = arith.constant 0 : index
    %c0_2 = arith.constant 0 : index
    %1 = vector.load %arg1[%c0_1, %c0_2] : memref<8x128xf32, #tpu.memory_space<vmem>>, vector<8x128xf32>
    %cst = arith.constant dense<0.000000e+00> : vector<8x128xf32>
    %2 = tpu.matmul %1, %0, %cst {dimension_numbers = #tpu.dot_dimension_numbers<[1], [0], [0], [1], [0, 0, 1, 1], [], []>} : vector<8x128xf32>, vector<128x128xf32>, vector<8x128xf32> -> vector<8x128xf32>
    %c0_3 = arith.constant 0 : index
    %c0_4 = arith.constant 0 : index
    %3 = vector.load %arg5[%c0_3, %c0_4] : memref<16x128xf32, #tpu.memory_space<vmem>>, vector<8x128xf32>
    tpu.vector_store %arg5[%c0_3, %c0_4], %2 {strides = array<i32>} : memref<16x128xf32, #tpu.memory_space<vmem>>, vector<8x128xf32>,
    %c0_5 = arith.constant 0 : index
    %c0_6 = arith.constant 0 : index
    %4 = vector.load %arg2[%c0_5, %c0_6] : memref<8x128xf32, #tpu.memory_space<vmem>>, vector<8x128xf32>
    %cst_7 = arith.constant dense<0.000000e+00> : vector<8x128xf32>
    %5 = tpu.matmul %4, %0, %cst_7 {dimension_numbers = #tpu.dot_dimension_numbers<[1], [0], [0], [1], [0, 0, 1, 1], [], []>} : vector<8x128xf32>, vector<128x128xf32>, vector<8x128xf32> -> vector<8x128xf32>
    %c8 = arith.constant 8 : index
    %c0_8 = arith.constant 0 : index
    %6 = vector.load %arg5[%c8, %c0_8] : memref<16x128xf32, #tpu.memory_space<vmem>>, vector<8x128xf32>
    tpu.vector_store %arg5[%c8, %c0_8], %5 {strides = array<i32>} : memref<16x128xf32, #tpu.memory_space<vmem>>, vector<8x128xf32>,
    %c0_9 = arith.constant 0 : index
    %c0_10 = arith.constant 0 : index
    %7 = vector.load %arg5[%c0_9, %c0_10] : memref<16x128xf32, #tpu.memory_space<vmem>>, vector<16x128xf32>
    %8 = tpu.iota {dimensions = array<i32: 0>} : vector<16x128xi32>
    %c8_i32 = arith.constant 8 : i32
    %c0_i32 = arith.constant 0 : i32
    %9 = arith.cmpi eq, %c8_i32, %c0_i32 : i32
    %c1_i32 = arith.constant 1 : i32
    %10 = arith.select %9, %c1_i32, %c8_i32 : i32
    %11 = vector.broadcast %10 : i32 to vector<16x128xi32>
    %12 = arith.remsi %8, %11 : vector<16x128xi32>
    %c0_i32_11 = arith.constant 0 : i32
    %13 = vector.broadcast %c0_i32_11 : i32 to vector<16x128xi32>
    %14 = arith.cmpi ne, %12, %13 : vector<16x128xi32>
    %c0_i32_12 = arith.constant 0 : i32
    %15 = vector.broadcast %c0_i32_12 : i32 to vector<16x128xi32>
    %16 = arith.cmpi slt, %12, %15 : vector<16x128xi32>
    %c0_i32_13 = arith.constant 0 : i32
    %17 = arith.cmpi slt, %10, %c0_i32_13 : i32
    %18 = vector.broadcast %17 : i1 to vector<16x128xi1>
    %19 = vector.broadcast %18 : vector<16x128xi1> to vector<16x128xi1>
    %20 = arith.xori %16, %19 : vector<16x128xi1>
    %21 = arith.andi %20, %14 : vector<16x128xi1>
    %22 = vector.broadcast %10 : i32 to vector<16x128xi32>
    %23 = arith.addi %12, %22 : vector<16x128xi32>
    %24 = arith.select %21, %23, %12 : vector<16x128xi1>, vector<16x128xi32>
    %c2_i32 = arith.constant 2 : i32
    %c0_i32_14 = arith.constant 0 : i32
    %25 = arith.cmpi eq, %c2_i32, %c0_i32_14 : i32
    %c1_i32_15 = arith.constant 1 : i32
    %26 = arith.select %25, %c1_i32_15, %c2_i32 : i32
    %27 = vector.broadcast %26 : i32 to vector<16x128xi32>
    %28 = arith.remsi %24, %27 : vector<16x128xi32>
    %c0_i32_16 = arith.constant 0 : i32
    %29 = vector.broadcast %c0_i32_16 : i32 to vector<16x128xi32>
    %30 = arith.cmpi ne, %28, %29 : vector<16x128xi32>
    %c0_i32_17 = arith.constant 0 : i32
    %31 = vector.broadcast %c0_i32_17 : i32 to vector<16x128xi32>
    %32 = arith.cmpi slt, %28, %31 : vector<16x128xi32>
    %c0_i32_18 = arith.constant 0 : i32
    %33 = arith.cmpi slt, %26, %c0_i32_18 : i32
    %34 = vector.broadcast %33 : i1 to vector<16x128xi1>
    %35 = vector.broadcast %34 : vector<16x128xi1> to vector<16x128xi1>
    %36 = arith.xori %32, %35 : vector<16x128xi1>
    %37 = arith.andi %36, %30 : vector<16x128xi1>
    %38 = vector.broadcast %26 : i32 to vector<16x128xi32>
    %39 = arith.addi %28, %38 : vector<16x128xi32>
    %40 = arith.select %37, %39, %28 : vector<16x128xi1>, vector<16x128xi32>
    %c0_i32_19 = arith.constant 0 : i32
    %41 = vector.broadcast %c0_i32_19 : i32 to vector<16x128xi32>
    %42 = arith.cmpi eq, %40, %41 : vector<16x128xi32>
    %c0_i32_20 = arith.constant 0 : i32
    %43 = vector.broadcast %c0_i32_20 : i32 to vector<16x128xi32>
    %44 = arith.cmpi sgt, %24, %43 : vector<16x128xi32>
    %c7_i32 = arith.constant 7 : i32
    %45 = vector.broadcast %c7_i32 : i32 to vector<16x128xi32>
    %46 = arith.cmpi slt, %24, %45 : vector<16x128xi32>
    %47 = arith.andi %42, %46 : vector<16x128xi1>
    %cst_21 = arith.constant dense<true> : vector<16x128xi1>
    %48 = arith.xori %42, %cst_21 : vector<16x128xi1>
    %49 = arith.andi %48, %46 : vector<16x128xi1>
    %cst_22 = arith.constant dense<true> : vector<16x128xi1>
    %50 = arith.xori %42, %cst_22 : vector<16x128xi1>
    %51 = arith.andi %50, %44 : vector<16x128xi1>
    %52 = arith.andi %42, %44 : vector<16x128xi1>
    %c15_i32 = arith.constant 15 : i32
    %53 = tpu.dynamic_rotate %7 by %c15_i32 dim 0 : vector<16x128xf32>, i32 -> vector<16x128xf32>
    %c1_i32_23 = arith.constant 1 : i32
    %54 = tpu.dynamic_rotate %7 by %c1_i32_23 dim 0 : vector<16x128xf32>, i32 -> vector<16x128xf32>
    %55 = arith.minimumf %7, %53 : vector<16x128xf32>
    %56 = arith.maximumf %7, %54 : vector<16x128xf32>
    %57 = arith.select %51, %56, %7 : vector<16x128xi1>, vector<16x128xf32>
    %58 = arith.select %47, %55, %57 : vector<16x128xi1>, vector<16x128xf32>
    %c15_i32_24 = arith.constant 15 : i32
    %59 = tpu.dynamic_rotate %58 by %c15_i32_24 dim 0 : vector<16x128xf32>, i32 -> vector<16x128xf32>
    %c1_i32_25 = arith.constant 1 : i32
    %60 = tpu.dynamic_rotate %58 by %c1_i32_25 dim 0 : vector<16x128xf32>, i32 -> vector<16x128xf32>
    %61 = arith.minimumf %58, %59 : vector<16x128xf32>
    %62 = arith.maximumf %58, %60 : vector<16x128xf32>
    %63 = arith.select %52, %62, %58 : vector<16x128xi1>, vector<16x128xf32>
    %64 = arith.select %49, %61, %63 : vector<16x128xi1>, vector<16x128xf32>
    %c15_i32_26 = arith.constant 15 : i32
    %65 = tpu.dynamic_rotate %64 by %c15_i32_26 dim 0 : vector<16x128xf32>, i32 -> vector<16x128xf32>
    %c1_i32_27 = arith.constant 1 : i32
    %66 = tpu.dynamic_rotate %64 by %c1_i32_27 dim 0 : vector<16x128xf32>, i32 -> vector<16x128xf32>
    %67 = arith.minimumf %64, %65 : vector<16x128xf32>
    %68 = arith.maximumf %64, %66 : vector<16x128xf32>
    %69 = arith.select %51, %68, %64 : vector<16x128xi1>, vector<16x128xf32>
    %70 = arith.select %47, %67, %69 : vector<16x128xi1>, vector<16x128xf32>
    %c15_i32_28 = arith.constant 15 : i32
    %71 = tpu.dynamic_rotate %70 by %c15_i32_28 dim 0 : vector<16x128xf32>, i32 -> vector<16x128xf32>
    %c1_i32_29 = arith.constant 1 : i32
    %72 = tpu.dynamic_rotate %70 by %c1_i32_29 dim 0 : vector<16x128xf32>, i32 -> vector<16x128xf32>
    %73 = arith.minimumf %70, %71 : vector<16x128xf32>
    %74 = arith.maximumf %70, %72 : vector<16x128xf32>
    %75 = arith.select %52, %74, %70 : vector<16x128xi1>, vector<16x128xf32>
    %76 = arith.select %49, %73, %75 : vector<16x128xi1>, vector<16x128xf32>
    %c15_i32_30 = arith.constant 15 : i32
    %77 = tpu.dynamic_rotate %76 by %c15_i32_30 dim 0 : vector<16x128xf32>, i32 -> vector<16x128xf32>
    %c1_i32_31 = arith.constant 1 : i32
    %78 = tpu.dynamic_rotate %76 by %c1_i32_31 dim 0 : vector<16x128xf32>, i32 -> vector<16x128xf32>
    %79 = arith.minimumf %76, %77 : vector<16x128xf32>
    %80 = arith.maximumf %76, %78 : vector<16x128xf32>
    %81 = arith.select %51, %80, %76 : vector<16x128xi1>, vector<16x128xf32>
    %82 = arith.select %47, %79, %81 : vector<16x128xi1>, vector<16x128xf32>
    %c15_i32_32 = arith.constant 15 : i32
    %83 = tpu.dynamic_rotate %82 by %c15_i32_32 dim 0 : vector<16x128xf32>, i32 -> vector<16x128xf32>
    %c1_i32_33 = arith.constant 1 : i32
    %84 = tpu.dynamic_rotate %82 by %c1_i32_33 dim 0 : vector<16x128xf32>, i32 -> vector<16x128xf32>
    %85 = arith.minimumf %82, %83 : vector<16x128xf32>
    %86 = arith.maximumf %82, %84 : vector<16x128xf32>
    %87 = arith.select %52, %86, %82 : vector<16x128xi1>, vector<16x128xf32>
    %88 = arith.select %49, %85, %87 : vector<16x128xi1>, vector<16x128xf32>
    %c15_i32_34 = arith.constant 15 : i32
    %89 = tpu.dynamic_rotate %88 by %c15_i32_34 dim 0 : vector<16x128xf32>, i32 -> vector<16x128xf32>
    %c1_i32_35 = arith.constant 1 : i32
    %90 = tpu.dynamic_rotate %88 by %c1_i32_35 dim 0 : vector<16x128xf32>, i32 -> vector<16x128xf32>
    %91 = arith.minimumf %88, %89 : vector<16x128xf32>
    %92 = arith.maximumf %88, %90 : vector<16x128xf32>
    %93 = arith.select %51, %92, %88 : vector<16x128xi1>, vector<16x128xf32>
    %94 = arith.select %47, %91, %93 : vector<16x128xi1>, vector<16x128xf32>
    %c15_i32_36 = arith.constant 15 : i32
    %95 = tpu.dynamic_rotate %94 by %c15_i32_36 dim 0 : vector<16x128xf32>, i32 -> vector<16x128xf32>
    %c1_i32_37 = arith.constant 1 : i32
    %96 = tpu.dynamic_rotate %94 by %c1_i32_37 dim 0 : vector<16x128xf32>, i32 -> vector<16x128xf32>
    %97 = arith.minimumf %94, %95 : vector<16x128xf32>
    %98 = arith.maximumf %94, %96 : vector<16x128xf32>
    %99 = arith.select %52, %98, %94 : vector<16x128xi1>, vector<16x128xf32>
    %100 = arith.select %49, %97, %99 : vector<16x128xi1>, vector<16x128xf32>
    %101 = vector.extract_strided_slice %100 {offsets = [0, 0], sizes = [8, 128], strides = [1, 1]} : vector<16x128xf32> to vector<8x128xf32>
    %102 = vector.extract_strided_slice %100 {offsets = [8, 0], sizes = [8, 128], strides = [1, 1]} : vector<16x128xf32> to vector<8x128xf32>
    %103 = arith.subf %101, %102 : vector<8x128xf32>
    %104 = arith.mulf %103, %103 : vector<8x128xf32>
    %cst_38 = arith.constant 1.000000e+00 : f32
    %105 = vector.broadcast %cst_38 : f32 to vector<128x1xf32>
    %cst_39 = arith.constant dense<0.000000e+00> : vector<8x1xf32>
    %106 = tpu.matmul %104, %105, %cst_39 {dimension_numbers = #tpu.dot_dimension_numbers<[1], [0], [0], [1], [0, 0, 1, 1], [], []>} : vector<8x128xf32>, vector<128x1xf32>, vector<8x1xf32> -> vector<8x1xf32>
    %107 = vector.shape_cast %106 : vector<8x1xf32> to vector<1x8x1xf32>
    %cst_40 = arith.constant dense<0.000000e+00> : vector<1xf32>
    %108 = vector.multi_reduction <add>, %107, %cst_40 [1, 2] : vector<1x8x1xf32> to vector<1xf32>
    %109 = vector.shape_cast %108 : vector<1xf32> to vector<1x1x1xf32>
    %110 = vector.extract %109[0, 0, 0] : f32 from vector<1x1x1xf32>
    %c0_41 = arith.constant 0 : index
    %c0_42 = arith.constant 0 : index
    %111 = memref.load %arg4[%c0_41, %c0_42] : memref<1x1xf32, #tpu.memory_space<smem>>
    memref.store %110, %arg4[%c0_41, %c0_42] : memref<1x1xf32, #tpu.memory_space<smem>>
    return
  }
  func.func @transform_0(%arg0: i32) -> (i32, i32) {
    %c0_i32 = arith.constant 0 : i32
    %c0_i32_0 = arith.constant 0 : i32
    %c0_i32_1 = arith.constant 0 : i32
    return %c0_i32, %c0_i32_0 : i32, i32
  }
  func.func @transform_1(%arg0: i32) -> (i32, i32) {
    %c0_i32 = arith.constant 0 : i32
    %c0_i32_0 = arith.constant 0 : i32
    %c0_i32_1 = arith.constant 0 : i32
    return %c0_i32, %c0_i32_0 : i32, i32
  }
  func.func @transform_2(%arg0: i32) -> (i32, i32) {
    %c0_i32 = arith.constant 0 : i32
    %c0_i32_0 = arith.constant 0 : i32
    return %c0_i32, %arg0 : i32, i32
  }
  func.func @transform_3(%arg0: i32) -> (i32, i32) {
    %c0_i32 = arith.constant 0 : i32
    %c0_i32_0 = arith.constant 0 : i32
    return %arg0, %c0_i32 : i32, i32
  }
}

</mosaic_0001>

<llo_original>
// kernel: swd_loss_pallas.1
$region0: #{swd_loss_pallas.1}
  #allocation0 [shape = 'u32[]', space=smem, size = 0x4, offset = 0x4, fixed_abs, tag = 'smem constant byte address 0x4 - core index']
  #allocation1 [shape = 'u32[144,128]{1,0:T(1,128)}', space=vmem, size = 0x12000, scoped, tag = 'internal scratch']
  #allocation2 [shape = 'f32[16,128]{1,0:T(8,128)}', space=vmem, size = 0x2000, scoped, tag = 'scratch operand']
  %s0 = inlined_call_operand.vmem [shape: f32[8,128], index: 0, kind: input, shape index: {}]
  %s1 = inlined_call_operand.vmem [shape: f32[8,128], index: 1, kind: input, shape index: {}]
  %s2 = inlined_call_operand.vmem [shape: f32[128,128], index: 2, kind: input, shape index: {}]
  %s3 = inlined_call_operand.hbm [shape: f32[1,1], index: 3, kind: output, shape index: {}]
  %s4 = sld [smem:[#allocation0]]
  $region22: #{swd_loss_pallas.1} parent=0
    _
  %s6 = ssub.s32 1, %s4
  %s7 = scalar_select 0, %s6, %s4
  $region1: #{swd_loss_pallas.1} parent=0
    #allocation3 [shape = 'u8[512]{0}', space=smem, size = 0x200, scoped, tag = 'output window, operand 0, single buffered']
    #allocation4 [shape = 's32[1]{0}', space=sflag, size = 0x4, scoped, tag = 'scoped memory for swd_loss_pallas.1']
    %8 = vsyncpa [#allocation4], 0
    // Predicated region
    $region2: #{swd_loss_pallas.1} parent=1 // pred_check
      _
    $region3: #{swd_loss_pallas.1} parent=1 // pred_check_branch
      %10 = sbr.rel (0) target = $region5
    $region4: #{swd_loss_pallas.1} parent=1 // pred_region
      _
    $region5: #{swd_loss_pallas.1} parent=1 // pred_fallthru
      _
    // Predicated region
    $region6: #{swd_loss_pallas.1} parent=1 // pred_check
      _
    $region7: #{swd_loss_pallas.1} parent=1 // pred_check_branch
      %12 = sbr.rel (0) target = $region9
    $region8: #{swd_loss_pallas.1} parent=1 // pred_region
      _
    $region9: #{swd_loss_pallas.1} parent=1 // pred_fallthru
      _
    // Predicated region
    $region10: #{swd_loss_pallas.1} parent=1 // pred_check
      _
    $region11: #{swd_loss_pallas.1} parent=1 // pred_check_branch
      %14 = sbr.rel (0) target = $region13
    $region12: #{swd_loss_pallas.1} parent=1 // pred_region
      _
    $region13: #{swd_loss_pallas.1} parent=1 // pred_fallthru
      _
    %v15 = vld [vmem:[%s2] sm:$0xff]
    %v16 = vld [vmem:[%s2 + $0x8] sm:$0xff]
    %v17 = vld [vmem:[%s2 + $0x10] sm:$0xff]
    %v18 = vld [vmem:[%s2 + $0x18] sm:$0xff]
    %v19 = vld [vmem:[%s2 + $0x20] sm:$0xff]
    %v20 = vld [vmem:[%s2 + $0x28] sm:$0xff]
    %v21 = vld [vmem:[%s2 + $0x30] sm:$0xff]
    %v22 = vld [vmem:[%s2 + $0x38] sm:$0xff]
    %v23 = vld [vmem:[%s2 + $0x40] sm:$0xff]
    %v24 = vld [vmem:[%s2 + $0x48] sm:$0xff]
    %v25 = vld [vmem:[%s2 + $0x50] sm:$0xff]
    %v26 = vld [vmem:[%s2 + $0x58] sm:$0xff]
    %v27 = vld [vmem:[%s2 + $0x60] sm:$0xff]
    %v28 = vld [vmem:[%s2 + $0x68] sm:$0xff]
    %v29 = vld [vmem:[%s2 + $0x70] sm:$0xff]
    %v30 = vld [vmem:[%s2 + $0x78] sm:$0xff]
    %v31 = vld [vmem:[%s0] sm:$0xff]
    %32 = vmatprep.subr.mxu0 0.0
    %33 = vmatpush1.msra.mxu0 %v15
    %34 = vmatprep.subr.mxu0 0.0
    %35 = vmatpush1.msra.mxu0 %v16
    %36 = vmatprep.subr.mxu0 0.0
    %37 = vmatpush1.msra.mxu0 %v17
    %38 = vmatprep.subr.mxu0 0.0
    %39 = vmatpush1.msra.mxu0 %v18
    %40 = vmatprep.subr.mxu0 0.0
    %41 = vmatpush1.msra.mxu0 %v19
    %42 = vmatprep.subr.mxu0 0.0
    %43 = vmatpush1.msra.mxu0 %v20
    %44 = vmatprep.subr.mxu0 0.0
    %45 = vmatpush1.msra.mxu0 %v21
    %46 = vmatprep.subr.mxu0 0.0
    %47 = vmatpush1.msra.mxu0 %v22
    %48 = vmatprep.subr.mxu0 0.0
    %49 = vmatpush1.msra.mxu0 %v23
    %50 = vmatprep.subr.mxu0 0.0
    %51 = vmatpush1.msra.mxu0 %v24
    %52 = vmatprep.subr.mxu0 0.0
    %53 = vmatpush1.msra.mxu0 %v25
    %54 = vmatprep.subr.mxu0 0.0
    %55 = vmatpush1.msra.mxu0 %v26
    %56 = vmatprep.subr.mxu0 0.0
    %57 = vmatpush1.msra.mxu0 %v27
    %58 = vmatprep.subr.mxu0 0.0
    %59 = vmatpush1.msra.mxu0 %v28
    %60 = vmatprep.subr.mxu0 0.0
    %61 = vmatpush1.msra.mxu0 %v29
    %62 = vmatprep.subr.mxu0 0.0
    %63 = vmatpush1.msra.mxu0 %v30
    %64 = vmatprep.subr.mxu0 0.0
    %65 = vmatpush1.msra.mxu0 0.0
    %66 = vmatprep.subr.mxu0 0.0
    %67 = vmatpush1.msra.mxu0 0.0
    %68 = vmatprep.subr.mxu0 0.0
    %69 = vmatpush1.msra.mxu0 0.0
    %70 = vmatprep.subr.mxu0 0.0
    %71 = vmatpush1.msra.mxu0 0.0
    %72 = vmatprep.subr.mxu0 0.0
    %73 = vmatpush1.msra.mxu0 0.0
    %74 = vmatprep.subr.mxu0 0.0
    %75 = vmatpush1.msra.mxu0 0.0
    %76 = vmatprep.subr.mxu0 0.0
    %77 = vmatpush1.msra.mxu0 0.0
    %78 = vmatprep.subr.mxu0 0.0
    %79 = vmatpush1.msra.mxu0 0.0
    %80 = vmatprep.subr.mxu0 0.0
    %81 = vmatpush1.msra.mxu0 0.0
    %82 = vmatprep.subr.mxu0 0.0
    %83 = vmatpush1.msra.mxu0 0.0
    %84 = vmatprep.subr.mxu0 0.0
    %85 = vmatpush1.msra.mxu0 0.0
    %86 = vmatprep.subr.mxu0 0.0
    %87 = vmatpush1.msra.mxu0 0.0
    %88 = vmatprep.subr.mxu0 0.0
    %89 = vmatpush1.msra.mxu0 0.0
    %90 = vmatprep.subr.mxu0 0.0
    %91 = vmatpush1.msra.mxu0 0.0
    %92 = vmatprep.subr.mxu0 0.0
    %93 = vmatpush1.msra.mxu0 0.0
    %94 = vmatprep.subr.mxu0 0.0
    %95 = vmatpush1.msra.mxu0 0.0
    %96 = vmatprep.mubr.f32.mxu0 0.0
    %97 = vmatmul.mubr.f32.gmra.mrb[0].mxu0 %v31
    %v98 = vpop.f32.mrb[0].mxu0
    %v99 = vadd.f32 0.0, %v98
    %v100 = vpop.f32.mrb[0].mxu0
    %101 = vdwg.mxu0
    %102 = vst [vmem:[#allocation2] sm:$0xff] %v99
    %v103 = vld [vmem:[%s1] sm:$0xff]
    %104 = vmatprep.subr.mxu0 0.0
    %105 = vmatpush1.msra.mxu0 %v15
    %106 = vmatprep.subr.mxu0 0.0
    %107 = vmatpush1.msra.mxu0 %v16
    %108 = vmatprep.subr.mxu0 0.0
    %109 = vmatpush1.msra.mxu0 %v17
    %110 = vmatprep.subr.mxu0 0.0
    %111 = vmatpush1.msra.mxu0 %v18
    %112 = vmatprep.subr.mxu0 0.0
    %113 = vmatpush1.msra.mxu0 %v19
    %114 = vmatprep.subr.mxu0 0.0
    %115 = vmatpush1.msra.mxu0 %v20
    %116 = vmatprep.subr.mxu0 0.0
    %117 = vmatpush1.msra.mxu0 %v21
    %118 = vmatprep.subr.mxu0 0.0
    %119 = vmatpush1.msra.mxu0 %v22
    %120 = vmatprep.subr.mxu0 0.0
    %121 = vmatpush1.msra.mxu0 %v23
    %122 = vmatprep.subr.mxu0 0.0
    %123 = vmatpush1.msra.mxu0 %v24
    %124 = vmatprep.subr.mxu0 0.0
    %125 = vmatpush1.msra.mxu0 %v25
    %126 = vmatprep.subr.mxu0 0.0
    %127 = vmatpush1.msra.mxu0 %v26
    %128 = vmatprep.subr.mxu0 0.0
    %129 = vmatpush1.msra.mxu0 %v27
    %130 = vmatprep.subr.mxu0 0.0
    %131 = vmatpush1.msra.mxu0 %v28
    %132 = vmatprep.subr.mxu0 0.0
    %133 = vmatpush1.msra.mxu0 %v29
    %134 = vmatprep.subr.mxu0 0.0
    %135 = vmatpush1.msra.mxu0 %v30
    %136 = vmatprep.subr.mxu0 0.0
    %137 = vmatpush1.msra.mxu0 0.0
    %138 = vmatprep.subr.mxu0 0.0
    %139 = vmatpush1.msra.mxu0 0.0
    %140 = vmatprep.subr.mxu0 0.0
    %141 = vmatpush1.msra.mxu0 0.0
    %142 = vmatprep.subr.mxu0 0.0
    %143 = vmatpush1.msra.mxu0 0.0
    %144 = vmatprep.subr.mxu0 0.0
    %145 = vmatpush1.msra.mxu0 0.0
    %146 = vmatprep.subr.mxu0 0.0
    %147 = vmatpush1.msra.mxu0 0.0
    %148 = vmatprep.subr.mxu0 0.0
    %149 = vmatpush1.msra.mxu0 0.0
    %150 = vmatprep.subr.mxu0 0.0
    %151 = vmatpush1.msra.mxu0 0.0
    %152 = vmatprep.subr.mxu0 0.0
    %153 = vmatpush1.msra.mxu0 0.0
    %154 = vmatprep.subr.mxu0 0.0
    %155 = vmatpush1.msra.mxu0 0.0
    %156 = vmatprep.subr.mxu0 0.0
    %157 = vmatpush1.msra.mxu0 0.0
    %158 = vmatprep.subr.mxu0 0.0
    %159 = vmatpush1.msra.mxu0 0.0
    %160 = vmatprep.subr.mxu0 0.0
    %161 = vmatpush1.msra.mxu0 0.0
    %162 = vmatprep.subr.mxu0 0.0
    %163 = vmatpush1.msra.mxu0 0.0
    %164 = vmatprep.subr.mxu0 0.0
    %165 = vmatpush1.msra.mxu0 0.0
    %166 = vmatprep.subr.mxu0 0.0
    %167 = vmatpush1.msra.mxu0 0.0
    %168 = vmatprep.mubr.f32.mxu0 0.0
    %169 = vmatmul.mubr.f32.gmra.mrb[0].mxu0 %v103
    %v170 = vpop.f32.mrb[0].mxu0
    %v171 = vadd.f32 0.0, %v170
    %v172 = vpop.f32.mrb[0].mxu0
    %173 = vdwg.mxu0
    %174 = vst [vmem:[#allocation2 + $0x8] sm:$0xff] %v171
    %v175 = vld [vmem:[#allocation2] sm:$0xff]
    %v176 = vld [vmem:[#allocation2 + $0x8] sm:$0xff]
    %v177 = vlaneseq
    %v178 = vshrl.u32 %v177, 7
    %v179 = vadd.s32 %v178, 8
    %vm180 = vcmp.lt.s32.totalorder %v178, 0
    %v181 = vsub.s32 0, %v178
    %v182 = vsel %vm180, %v181, %v178
    %v183 = vshrl.u32 %v182, 3
    %v184 = vand.u32 %v182, 7
    %v185 = vsub.s32 0, %v184
    %v186 = vsel %vm180, %v185, %v184
    %vm187 = vcmp.lt.s32.totalorder %v179, 0
    %v188 = vsub.s32 0, %v179
    %v189 = vsel %vm187, %v188, %v179
    %v190 = vshrl.u32 %v189, 3
    %v191 = vand.u32 %v189, 7
    %v192 = vsub.s32 0, %v191
    %v193 = vsel %vm187, %v192, %v191
    %vm194 = vcmp.ne.s32.totalorder %v186, 0
    %vm195 = vcmp.ne.s32.totalorder %v193, 0
    %vm196 = vcmp.lt.s32.totalorder %v186, 0
    %vm197 = vcmp.lt.s32.totalorder %v193, 0
    %vm198 = vmand %vm196, %vm194
    %vm199 = vmand %vm197, %vm195
    %v200 = vadd.s32 %v186, 8
    %v201 = vadd.s32 %v193, 8
    %v202 = vsel %vm198, %v200, %v186
    %v203 = vsel %vm199, %v201, %v193
    %vm204 = vcmp.lt.s32.totalorder %v202, 0
    %v205 = vsub.s32 0, %v202
    %v206 = vsel %vm204, %v205, %v202
    %v207 = vshrl.u32 %v206, 1
    %v208 = vand.u32 %v206, 1
    %v209 = vsub.s32 0, %v208
    %v210 = vsel %vm204, %v209, %v208
    %vm211 = vcmp.lt.s32.totalorder %v203, 0
    %v212 = vsub.s32 0, %v203
    %v213 = vsel %vm211, %v212, %v203
    %v214 = vshrl.u32 %v213, 1
    %v215 = vand.u32 %v213, 1
    %v216 = vsub.s32 0, %v215
    %v217 = vsel %vm211, %v216, %v215
    %vm218 = vcmp.ne.s32.totalorder %v210, 0
    %vm219 = vcmp.ne.s32.totalorder %v217, 0
    %vm220 = vcmp.lt.s32.totalorder %v210, 0
    %vm221 = vcmp.lt.s32.totalorder %v217, 0
    %vm222 = vmand %vm220, %vm218
    %vm223 = vmand %vm221, %vm219
    %v224 = vadd.s32 %v210, 2
    %v225 = vadd.s32 %v217, 2
    %v226 = vsel %vm222, %v224, %v210
    %v227 = vsel %vm223, %v225, %v217
    %vm228 = vcmp.eq.s32.totalorder %v226, 0
    %vm229 = vcmp.eq.s32.totalorder %v227, 0
    %vm230 = vcmp.gt.s32.totalorder %v202, 0
    %vm231 = vcmp.gt.s32.totalorder %v203, 0
    %vm232 = vcmp.lt.s32.totalorder %v202, 7
    %vm233 = vcmp.lt.s32.totalorder %v203, 7
    %vm234 = vmand %vm228, %vm232
    %vm235 = vmand %vm229, %vm233
    %vm236 = vmxor %vm228, 1
    %vm237 = vmxor %vm229, 1
    %vm238 = vmand %vm236, %vm232
    %vm239 = vmand %vm237, %vm233
    %vm240 = vmand %vm236, %vm230
    %vm241 = vmand %vm237, %vm231
    %vm242 = vmand %vm228, %vm230
    %vm243 = vmand %vm229, %vm231
    %v244 = vrot.slane %v175, 1
    %v245 = vrot.slane %v176, 1
    %vm246 = vcmp.lt.s32.totalorder %v178, 7
    %v247 = vsel %vm246, %v244, %v245
    %v248 = vsel %vm246, %v245, %v244
    %v249 = vrot.slane %v175, 7
    %v250 = vrot.slane %v176, 7
    %vm251 = vcmp.lt.s32.totalorder %v178, 1
    %v252 = vsel %vm251, %v249, %v250
    %v253 = vsel %vm251, %v250, %v249
    %v254 = vmin.f32 %v175, %v247
    %v255 = vmin.f32 %v176, %v248
    %v256 = vmax.f32 %v175, %v253
    %v257 = vmax.f32 %v176, %v252
    %v258 = vsel %vm240, %v256, %v175
    %v259 = vsel %vm241, %v257, %v176
    %v260 = vsel %vm234, %v254, %v258
    %v261 = vsel %vm235, %v255, %v259
    %v262 = vrot.slane %v260, 1
    %v263 = vrot.slane %v261, 1
    %v264 = vsel %vm246, %v262, %v263
    %v265 = vsel %vm246, %v263, %v262
    %v266 = vrot.slane %v260, 7
    %v267 = vrot.slane %v261, 7
    %v268 = vsel %vm251, %v266, %v267
    %v269 = vsel %vm251, %v267, %v266
    %v270 = vmin.f32 %v260, %v264
    %v271 = vmin.f32 %v261, %v265
    %v272 = vmax.f32 %v260, %v269
    %v273 = vmax.f32 %v261, %v268
    %v274 = vsel %vm242, %v272, %v260
    %v275 = vsel %vm243, %v273, %v261
    %v276 = vsel %vm238, %v270, %v274
    %v277 = vsel %vm239, %v271, %v275
    %v278 = vrot.slane %v276, 1
    %v279 = vrot.slane %v277, 1
    %v280 = vsel %vm246, %v278, %v279
    %v281 = vsel %vm246, %v279, %v278
    %v282 = vrot.slane %v276, 7
    %v283 = vrot.slane %v277, 7
    %v284 = vsel %vm251, %v282, %v283
    %v285 = vsel %vm251, %v283, %v282
    %v286 = vmin.f32 %v276, %v280
    %v287 = vmin.f32 %v277, %v281
    %v288 = vmax.f32 %v276, %v285
    %v289 = vmax.f32 %v277, %v284
    %v290 = vsel %vm240, %v288, %v276
    %v291 = vsel %vm241, %v289, %v277
    %v292 = vsel %vm234, %v286, %v290
    %v293 = vsel %vm235, %v287, %v291
    %v294 = vrot.slane %v292, 1
    %v295 = vrot.slane %v293, 1
    %v296 = vsel %vm246, %v294, %v295
    %v297 = vsel %vm246, %v295, %v294
    %v298 = vrot.slane %v292, 7
    %v299 = vrot.slane %v293, 7
    %v300 = vsel %vm251, %v298, %v299
    %v301 = vsel %vm251, %v299, %v298
    %v302 = vmin.f32 %v292, %v296
    %v303 = vmin.f32 %v293, %v297
    %v304 = vmax.f32 %v292, %v301
    %v305 = vmax.f32 %v293, %v300
    %v306 = vsel %vm242, %v304, %v292
    %v307 = vsel %vm243, %v305, %v293
    %v308 = vsel %vm238, %v302, %v306
    %v309 = vsel %vm239, %v303, %v307
    %v310 = vrot.slane %v308, 1
    %v311 = vrot.slane %v309, 1
    %v312 = vsel %vm246, %v310, %v311
    %v313 = vsel %vm246, %v311, %v310
    %v314 = vrot.slane %v308, 7
    %v315 = vrot.slane %v309, 7
    %v316 = vsel %vm251, %v314, %v315
    %v317 = vsel %vm251, %v315, %v314
    %v318 = vmin.f32 %v308, %v312
    %v319 = vmin.f32 %v309, %v313
    %v320 = vmax.f32 %v308, %v317
    %v321 = vmax.f32 %v309, %v316
    %v322 = vsel %vm240, %v320, %v308
    %v323 = vsel %vm241, %v321, %v309
    %v324 = vsel %vm234, %v318, %v322
    %v325 = vsel %vm235, %v319, %v323
    %v326 = vrot.slane %v324, 1
    %v327 = vrot.slane %v325, 1
    %v328 = vsel %vm246, %v326, %v327
    %v329 = vsel %vm246, %v327, %v326
    %v330 = vrot.slane %v324, 7
    %v331 = vrot.slane %v325, 7
    %v332 = vsel %vm251, %v330, %v331
    %v333 = vsel %vm251, %v331, %v330
    %v334 = vmin.f32 %v324, %v328
    %v335 = vmin.f32 %v325, %v329
    %v336 = vmax.f32 %v324, %v333
    %v337 = vmax.f32 %v325, %v332
    %v338 = vsel %vm242, %v336, %v324
    %v339 = vsel %vm243, %v337, %v325
    %v340 = vsel %vm238, %v334, %v338
    %v341 = vsel %vm239, %v335, %v339
    %v342 = vrot.slane %v340, 1
    %v343 = vrot.slane %v341, 1
    %v344 = vsel %vm246, %v342, %v343
    %v345 = vsel %vm246, %v343, %v342
    %v346 = vrot.slane %v340, 7
    %v347 = vrot.slane %v341, 7
    %v348 = vsel %vm251, %v346, %v347
    %v349 = vsel %vm251, %v347, %v346
    %v350 = vmin.f32 %v340, %v344
    %v351 = vmin.f32 %v341, %v345
    %v352 = vmax.f32 %v340, %v349
    %v353 = vmax.f32 %v341, %v348
    %v354 = vsel %vm240, %v352, %v340
    %v355 = vsel %vm241, %v353, %v341
    %v356 = vsel %vm234, %v350, %v354
    %v357 = vsel %vm235, %v351, %v355
    %v358 = vrot.slane %v356, 1
    %v359 = vrot.slane %v357, 1
    %v360 = vsel %vm246, %v358, %v359
    %v361 = vsel %vm246, %v359, %v358
    %v362 = vrot.slane %v356, 7
    %v363 = vrot.slane %v357, 7
    %v364 = vsel %vm251, %v362, %v363
    %v365 = vsel %vm251, %v363, %v362
    %v366 = vmin.f32 %v356, %v360
    %v367 = vmin.f32 %v357, %v361
    %v368 = vmax.f32 %v356, %v365
    %v369 = vmax.f32 %v357, %v364
    %v370 = vsel %vm242, %v368, %v356
    %v371 = vsel %vm243, %v369, %v357
    %v372 = vsel %vm238, %v366, %v370
    %v373 = vsel %vm239, %v367, %v371
    %v374 = vsub.f32 %v372, %v373
    %v375 = vmul.f32 %v374, %v374
    %376 = vmatprep.subr.mxu0 0.0
    %377 = vmatpush1.msra.mxu0 1.0
    %378 = vmatprep.subr.mxu0 0.0
    %379 = vmatpush1.msra.mxu0 1.0
    %380 = vmatprep.subr.mxu0 0.0
    %381 = vmatpush1.msra.mxu0 1.0
    %382 = vmatprep.subr.mxu0 0.0
    %383 = vmatpush1.msra.mxu0 1.0
    %384 = vmatprep.subr.mxu0 0.0
    %385 = vmatpush1.msra.mxu0 1.0
    %386 = vmatprep.subr.mxu0 0.0
    %387 = vmatpush1.msra.mxu0 1.0
    %388 = vmatprep.subr.mxu0 0.0
    %389 = vmatpush1.msra.mxu0 1.0
    %390 = vmatprep.subr.mxu0 0.0
    %391 = vmatpush1.msra.mxu0 1.0
    %392 = vmatprep.subr.mxu0 0.0
    %393 = vmatpush1.msra.mxu0 1.0
    %394 = vmatprep.subr.mxu0 0.0
    %395 = vmatpush1.msra.mxu0 1.0
    %396 = vmatprep.subr.mxu0 0.0
    %397 = vmatpush1.msra.mxu0 1.0
    %398 = vmatprep.subr.mxu0 0.0
    %399 = vmatpush1.msra.mxu0 1.0
    %400 = vmatprep.subr.mxu0 0.0
    %401 = vmatpush1.msra.mxu0 1.0
    %402 = vmatprep.subr.mxu0 0.0
    %403 = vmatpush1.msra.mxu0 1.0
    %404 = vmatprep.subr.mxu0 0.0
    %405 = vmatpush1.msra.mxu0 1.0
    %406 = vmatprep.subr.mxu0 0.0
    %407 = vmatpush1.msra.mxu0 1.0
    %408 = vmatprep.subr.mxu0 0.0
    %409 = vmatpush1.msra.mxu0 0.0
    %410 = vmatprep.subr.mxu0 0.0
    %411 = vmatpush1.msra.mxu0 0.0
    %412 = vmatprep.subr.mxu0 0.0
    %413 = vmatpush1.msra.mxu0 0.0
    %414 = vmatprep.subr.mxu0 0.0
    %415 = vmatpush1.msra.mxu0 0.0
    %416 = vmatprep.subr.mxu0 0.0
    %417 = vmatpush1.msra.mxu0 0.0
    %418 = vmatprep.subr.mxu0 0.0
    %419 = vmatpush1.msra.mxu0 0.0
    %420 = vmatprep.subr.mxu0 0.0
    %421 = vmatpush1.msra.mxu0 0.0
    %422 = vmatprep.subr.mxu0 0.0
    %423 = vmatpush1.msra.mxu0 0.0
    %424 = vmatprep.subr.mxu0 0.0
    %425 = vmatpush1.msra.mxu0 0.0
    %426 = vmatprep.subr.mxu0 0.0
    %427 = vmatpush1.msra.mxu0 0.0
    %428 = vmatprep.subr.mxu0 0.0
    %429 = vmatpush1.msra.mxu0 0.0
    %430 = vmatprep.subr.mxu0 0.0
    %431 = vmatpush1.msra.mxu0 0.0
    %432 = vmatprep.subr.mxu0 0.0
    %433 = vmatpush1.msra.mxu0 0.0
    %434 = vmatprep.subr.mxu0 0.0
    %435 = vmatpush1.msra.mxu0 0.0
    %436 = vmatprep.subr.mxu0 0.0
    %437 = vmatpush1.msra.mxu0 0.0
    %438 = vmatprep.subr.mxu0 0.0
    %439 = vmatpush1.msra.mxu0 0.0
    %440 = vmatprep.mubr.f32.mxu0 0.0
    %441 = vmatmul.mubr.f32.gmra.mrb[0].mxu0 %v375
    %v442 = vpop.f32.mrb[0].mxu0
    %v443 = vadd.f32 0.0, %v442
    %v444 = vpop.f32.mrb[0].mxu0
    %445 = vdwg.mxu0
    %vm446 = vcmask 7168
    %v447 = vsel %vm446, %v443, 0.0
    %448 = vadd.xlane.f32.xlu0 %v447
    %v449 = vpop.xlane.xlu0 %448
    %v450 = vrot.slane %v449, 4
    %v451 = vadd.f32 %v449, %v450
    %v452 = vrot.slane %v451, 2
    %v453 = vadd.f32 %v451, %v452
    %v454 = vrot.slane %v453, 1
    %v455 = vadd.f32 %v453, %v454
    %s456 = vtos %v455
    %s457 = scalar_lea.smem [#allocation3], 0
    %458 = sst [smem:[%s457]] %s456
    // Predicated region
    $region14: #{swd_loss_pallas.1} parent=1 // pred_check
      _
    $region15: #{swd_loss_pallas.1} parent=1 // pred_check_branch
      %460 = sbr.rel (0) target = $region17
    $region16: #{swd_loss_pallas.1} parent=1 // pred_region
      %s462 = ssub.s32 16, 16
      %463 = vsyncadd [#allocation4], %s462
      %466 = dma.smem_to_hbm [#allocation3], 16, %s3, [#allocation4]
    $region17: #{swd_loss_pallas.1} parent=1 // pred_fallthru
      _
    // Predicated region
    $region18: #{swd_loss_pallas.1} parent=1 // pred_check
      _
    $region19: #{swd_loss_pallas.1} parent=1 // pred_check_branch
      %468 = sbr.rel (0) target = $region21
    $region20: #{swd_loss_pallas.1} parent=1 // pred_region
      %469 = dma.done [#allocation4], 16
    $region21: #{swd_loss_pallas.1} parent=1 // pred_fallthru
      _
    %470 = sfence
    %471 = vsyncpa [#allocation4], 1

</llo_original>
